<compile_context>
chip_gen: v6e
topology: v6e:2x2x1
jax: 0.10.0
libtpu: 0.0.40
codegen_flags: <defaults>
</compile_context>

<pallas_src>
import functools

import jax
import jax.numpy as jnp
from jax.experimental import pallas as pl
from jax.experimental.pallas import tpu as pltpu


def _round_up(a, m):
    return ((a + m - 1) // m) * m


def _conv3x3_elu_kernel(x_ref, w_ref, b_ref, o_ref, *, wp, tile_q):
    # x_ref: (1, Cin, Lp)      bf16  padded image, spatially flattened, row stride wp.
    # w_ref: (9, Cout, Cin)    bf16  one (Cout, Cin) matrix per 3x3 tap, t = dy*3 + dx.
    # b_ref: (Cout, 1)         f32   bias.
    # o_ref: (1, Cout, tile_q) f32   output on the padded-row flat grid (lane-dense).
    cout = o_ref.shape[1]
    halo = 2 * wp + 2
    q0 = pl.multiple_of(pl.program_id(1) * tile_q, 128)

    # One 128-aligned dynamic load of the tile + halo; the 9 tap views are static
    # lane-offset slices of the loaded value (XLU shifts, cheap vs. HBM traffic).
    xw = x_ref[0, :, pl.ds(q0, tile_q + halo)]            # (Cin, tile_q + halo) bf16

    acc = jnp.zeros((cout, tile_q), jnp.float32)
    for t in range(9):
        dy, dx = divmod(t, 3)
        s = dy * wp + dx
        acc = acc + jnp.dot(w_ref[t], xw[:, s:s + tile_q],
                            preferred_element_type=jnp.float32)
    acc = acc + b_ref[...]                                # (Cout, 1) broadcast add

    # ELU(alpha=1): x if x > 0 else expm1(x).  expm1 computed without cancellation
    # via tanh(x/2)*(exp(x)+1); min() keeps the dead (positive) branch finite.
    neg = jnp.minimum(acc, 0.0)
    expm1_neg = jnp.tanh(neg * 0.5) * (jnp.exp(neg) + 1.0)
    acc = jnp.where(acc > 0.0, acc, expm1_neg)

    o_ref[0] = acc.astype(o_ref.dtype)


def _pick_tile_q(q, cin, cout, n_batch, wp, vmem_limit):
    """Largest lane-dense (multiple of 128) spatial tile that fits the VMEM budget
    together with the resident bf16 image and the double-buffered f32 output block,
    while keeping a few grid steps for pipelining / multi-TensorCore sharding."""
    halo = 2 * wp + 2
    x_block = 2 * cin * _round_up(q + 4096 + halo, 128) * 2    # double-buffered bf16
    w_bytes = 2 * 9 * cout * cin * 2
    budget_out = vmem_limit - x_block - w_bytes - (1 << 20)
    if budget_out <= 0:
        max_by_vmem = 128
    else:
        max_by_vmem = max(128, (budget_out // (cout * 4 * 2)) // 128 * 128)
    t = int(min(_round_up(q, 128), 4096, max_by_vmem))
    # Keep >= ~4 grid steps when batch is small (v7x 2-TC sharding / pipelining).
    while t > 128 and n_batch * ((q + t - 1) // t) < 4:
        t = max(128, _round_up(t // 2, 128))
    return t


@jax.jit
def conv_block(x_nchw, weight, bias):
    """ConvBlock forward: ReflectionPad2d(1) -> Conv2d(Cin, Cout, 3) -> ELU.

    x_nchw: (N, Cin, H, W) f32; weight: (Cout, Cin, 3, 3) f32; bias: (Cout,) f32.
    Returns (N, Cout, H, W) f32.
    """
    N, Cin, H, W = x_nchw.shape
    Cout = weight.shape[0]
    Hp, Wp = H + 2, W + 2
    Q = H * Wp                       # flat output length (incl. 2 junk cols per row)
    halo = 2 * Wp + 2

    # Generation-aware VMEM budget (v5e/v6e: 128 MiB, v7x: 64 MiB per TC).
    try:
        vmem_cap = int(pltpu.get_tpu_info().vmem_capacity_bytes)
    except Exception:
        vmem_cap = 64 * 1024 * 1024
    vmem_limit = min(max(vmem_cap // 2, 32 * 1024 * 1024), 64 * 1024 * 1024)

    tile_q = _pick_tile_q(Q, Cin, Cout, N, Wp, vmem_limit)
    qp = _round_up(Q, tile_q)                       # cdiv tiling: padded flat extent
    lp = _round_up(qp + halo, 128)                  # input extent incl. halo of last tile

    # Reflection pad, cast to bf16 (fuses with the pad), flatten spatial with row
    # stride Wp, zero-extend so every tile's halo read stays in bounds.
    x_pad = jnp.pad(x_nchw, ((0, 0), (0, 0), (1, 1), (1, 1)), mode="reflect")
    x_flat = x_pad.astype(jnp.bfloat16).reshape(N, Cin, Hp * Wp)
    x_flat = jnp.pad(x_flat, ((0, 0), (0, 0), (0, lp - Hp * Wp)))

    # (Cout, Cin, 3, 3) -> (9, Cout, Cin) with t = dy*3 + dx (matches kernel shifts).
    w9 = jnp.transpose(weight, (2, 3, 0, 1)).reshape(9, Cout, Cin).astype(jnp.bfloat16)
    b2 = bias.reshape(Cout, 1).astype(jnp.float32)

    grid = (N, qp // tile_q)
    out_flat = pl.pallas_call(
        functools.partial(_conv3x3_elu_kernel, wp=Wp, tile_q=tile_q),
        out_shape=jax.ShapeDtypeStruct((N, Cout, qp), jnp.float32),
        grid_spec=pltpu.PrefetchScalarGridSpec(
            num_scalar_prefetch=0,
            grid=grid,
            in_specs=[
                # Whole padded image per batch element; index map is constant in j,
                # so it is DMA'd once per n and stays resident across spatial tiles.
                pl.BlockSpec((1, Cin, lp), lambda n, j: (n, 0, 0)),
                pl.BlockSpec((9, Cout, Cin), lambda n, j: (0, 0, 0)),
                pl.BlockSpec((Cout, 1), lambda n, j: (0, 0)),
            ],
            out_specs=pl.BlockSpec((1, Cout, tile_q), lambda n, j: (n, 0, j)),
        ),
        compiler_params=pltpu.CompilerParams(
            dimension_semantics=("parallel", "parallel"),
            vmem_limit_bytes=vmem_limit,
        ),
    )(x_flat, w9, b2)

    # Drop the tail tile and the 2 junk columns per row; single cheap XLA copy.
    return out_flat[:, :, :Q].reshape(N, Cout, H, Wp)[..., :W]


def _reference(x_nchw, weight, bias):
    """Pure-JAX f32 reference (XLA conv) for correctness check."""
    x_pad = jnp.pad(x_nchw, ((0, 0), (0, 0), (1, 1), (1, 1)), mode="reflect")
    out = jax.lax.conv_general_dilated(
        x_pad, weight, window_strides=(1, 1), padding="VALID",
        dimension_numbers=("NCHW", "OIHW", "NCHW"))
    out = out + bias.reshape(1, -1, 1, 1)
    return jnp.where(out > 0, out, jnp.expm1(out))


def _run_case(key, n, cin, cout, h, w):
    k_x, k_w, k_b = jax.random.split(key, 3)
    x = jax.random.normal(k_x, (n, cin, h, w), dtype=jnp.float32)
    fan_in = cin * 9
    bound = 1.0 / (fan_in ** 0.5)
    weight = jax.random.uniform(k_w, (cout, cin, 3, 3), jnp.float32, -bound, bound)
    bias = jax.random.uniform(k_b, (cout,), jnp.float32, -bound, bound)

    out = jax.block_until_ready(conv_block(x, weight, bias))
    ref = jax.block_until_ready(_reference(x, weight, bias))

    assert out.shape == (n, cout, h, w)
    err = float(jnp.max(jnp.abs(out - ref)))
    # bf16 MXU operands with f32 accumulation vs f32 reference.
    assert jnp.allclose(out, ref, atol=2e-2, rtol=2e-2), (
        f"mismatch (n={n},cin={cin},cout={cout},h={h},w={w}): max abs err {err}")


if __name__ == "__main__":
    key = jax.random.PRNGKey(0)
    k1, k2 = jax.random.split(key)
    # Small base case consistent with the module.
    _run_case(k1, 2, 4, 8, 16, 16)
    # Larger channels and a spatial size whose flattened extent is not a multiple of
    # 128 (exercises the cdiv tail tile, crop path, and bf16 error at larger K).
    _run_case(k2, 2, 8, 16, 28, 28)
    print("KERNEL_OK")
</pallas_src>

<mosaic_0001>
module attributes {stable_mosaic.version = 11 : i64} {
  func.func @_conv3x3_elu_kernel(%arg0: i32, %arg1: i32, %arg2: memref<1x4x640xbf16, #tpu.memory_space<vmem>>, %arg3: memref<9x8x4xbf16, #tpu.memory_space<vmem>>, %arg4: memref<8x1xf32, #tpu.memory_space<vmem>>, %arg5: memref<1x8x256xf32, #tpu.memory_space<vmem>>) attributes {dimension_semantics = [#tpu.dimension_semantics<parallel>, #tpu.dimension_semantics<parallel>], iteration_bounds = array<i64: 2, 2>, scalar_prefetch = 0 : i64, scratch_operands = 0 : i64, tpu.core_type = #tpu.core_type<tc>, window_params = [{transform_indices = @transform_0, window_bounds = array<i64: 1, 4, 640>}, {pipeline_mode = #tpu.pipeline_mode<synchronous>, transform_indices = @transform_1, window_bounds = array<i64: 9, 8, 4>}, {pipeline_mode = #tpu.pipeline_mode<synchronous>, transform_indices = @transform_2, window_bounds = array<i64: 8, 1>}, {transform_indices = @transform_3, window_bounds = array<i64: 1, 8, 256>}]} {
    %c256_i32 = arith.constant 256 : i32
    %0 = arith.muli %arg1, %c256_i32 : i32
    %1 = tpu.assume_multiple %0, 128 : i32
    %c0 = arith.constant 0 : index
    %c0_0 = arith.constant 0 : index
    %2 = arith.index_cast %1 : i32 to index
    %3 = vector.load %arg2[%c0, %c0_0, %2] : memref<1x4x640xbf16, #tpu.memory_space<vmem>>, vector<1x4x294xbf16>
    %4 = vector.shape_cast %3 : vector<1x4x294xbf16> to vector<4x294xbf16>
    %cst = arith.constant 0.000000e+00 : f32
    %5 = vector.broadcast %cst : f32 to vector<8x256xf32>
    %c0_1 = arith.constant 0 : index
    %c0_2 = arith.constant 0 : index
    %c0_3 = arith.constant 0 : index
    %6 = vector.load %arg3[%c0_1, %c0_2, %c0_3] : memref<9x8x4xbf16, #tpu.memory_space<vmem>>, vector<1x8x4xbf16>
    %7 = vector.shape_cast %6 : vector<1x8x4xbf16> to vector<8x4xbf16>
    %8 = vector.extract_strided_slice %4 {offsets = [0, 0], sizes = [4, 256], strides = [1, 1]} : vector<4x294xbf16> to vector<4x256xbf16>
    %cst_4 = arith.constant dense<0.000000e+00> : vector<8x256xf32>
    %9 = tpu.matmul %7, %8, %cst_4 {dimension_numbers = #tpu.dot_dimension_numbers<[1], [0], [0], [1], [0, 0, 1, 1], [], []>} : vector<8x4xbf16>, vector<4x256xbf16>, vector<8x256xf32> -> vector<8x256xf32>
    %10 = arith.addf %5, %9 : vector<8x256xf32>
    %c1 = arith.constant 1 : index
    %c0_5 = arith.constant 0 : index
    %c0_6 = arith.constant 0 : index
    %11 = vector.load %arg3[%c1, %c0_5, %c0_6] : memref<9x8x4xbf16, #tpu.memory_space<vmem>>, vector<1x8x4xbf16>
    %12 = vector.shape_cast %11 : vector<1x8x4xbf16> to vector<8x4xbf16>
    %13 = vector.extract_strided_slice %4 {offsets = [0, 1], sizes = [4, 256], strides = [1, 1]} : vector<4x294xbf16> to vector<4x256xbf16>
    %cst_7 = arith.constant dense<0.000000e+00> : vector<8x256xf32>
    %14 = tpu.matmul %12, %13, %cst_7 {dimension_numbers = #tpu.dot_dimension_numbers<[1], [0], [0], [1], [0, 0, 1, 1], [], []>} : vector<8x4xbf16>, vector<4x256xbf16>, vector<8x256xf32> -> vector<8x256xf32>
    %15 = arith.addf %10, %14 : vector<8x256xf32>
    %c2 = arith.constant 2 : index
    %c0_8 = arith.constant 0 : index
    %c0_9 = arith.constant 0 : index
    %16 = vector.load %arg3[%c2, %c0_8, %c0_9] : memref<9x8x4xbf16, #tpu.memory_space<vmem>>, vector<1x8x4xbf16>
    %17 = vector.shape_cast %16 : vector<1x8x4xbf16> to vector<8x4xbf16>
    %18 = vector.extract_strided_slice %4 {offsets = [0, 2], sizes = [4, 256], strides = [1, 1]} : vector<4x294xbf16> to vector<4x256xbf16>
    %cst_10 = arith.constant dense<0.000000e+00> : vector<8x256xf32>
    %19 = tpu.matmul %17, %18, %cst_10 {dimension_numbers = #tpu.dot_dimension_numbers<[1], [0], [0], [1], [0, 0, 1, 1], [], []>} : vector<8x4xbf16>, vector<4x256xbf16>, vector<8x256xf32> -> vector<8x256xf32>
    %20 = arith.addf %15, %19 : vector<8x256xf32>
    %c3 = arith.constant 3 : index
    %c0_11 = arith.constant 0 : index
    %c0_12 = arith.constant 0 : index
    %21 = vector.load %arg3[%c3, %c0_11, %c0_12] : memref<9x8x4xbf16, #tpu.memory_space<vmem>>, vector<1x8x4xbf16>
    %22 = vector.shape_cast %21 : vector<1x8x4xbf16> to vector<8x4xbf16>
    %23 = vector.extract_strided_slice %4 {offsets = [0, 18], sizes = [4, 256], strides = [1, 1]} : vector<4x294xbf16> to vector<4x256xbf16>
    %cst_13 = arith.constant dense<0.000000e+00> : vector<8x256xf32>
    %24 = tpu.matmul %22, %23, %cst_13 {dimension_numbers = #tpu.dot_dimension_numbers<[1], [0], [0], [1], [0, 0, 1, 1], [], []>} : vector<8x4xbf16>, vector<4x256xbf16>, vector<8x256xf32> -> vector<8x256xf32>
    %25 = arith.addf %20, %24 : vector<8x256xf32>
    %c4 = arith.constant 4 : index
    %c0_14 = arith.constant 0 : index
    %c0_15 = arith.constant 0 : index
    %26 = vector.load %arg3[%c4, %c0_14, %c0_15] : memref<9x8x4xbf16, #tpu.memory_space<vmem>>, vector<1x8x4xbf16>
    %27 = vector.shape_cast %26 : vector<1x8x4xbf16> to vector<8x4xbf16>
    %28 = vector.extract_strided_slice %4 {offsets = [0, 19], sizes = [4, 256], strides = [1, 1]} : vector<4x294xbf16> to vector<4x256xbf16>
    %cst_16 = arith.constant dense<0.000000e+00> : vector<8x256xf32>
    %29 = tpu.matmul %27, %28, %cst_16 {dimension_numbers = #tpu.dot_dimension_numbers<[1], [0], [0], [1], [0, 0, 1, 1], [], []>} : vector<8x4xbf16>, vector<4x256xbf16>, vector<8x256xf32> -> vector<8x256xf32>
    %30 = arith.addf %25, %29 : vector<8x256xf32>
    %c5 = arith.constant 5 : index
    %c0_17 = arith.constant 0 : index
    %c0_18 = arith.constant 0 : index
    %31 = vector.load %arg3[%c5, %c0_17, %c0_18] : memref<9x8x4xbf16, #tpu.memory_space<vmem>>, vector<1x8x4xbf16>
    %32 = vector.shape_cast %31 : vector<1x8x4xbf16> to vector<8x4xbf16>
    %33 = vector.extract_strided_slice %4 {offsets = [0, 20], sizes = [4, 256], strides = [1, 1]} : vector<4x294xbf16> to vector<4x256xbf16>
    %cst_19 = arith.constant dense<0.000000e+00> : vector<8x256xf32>
    %34 = tpu.matmul %32, %33, %cst_19 {dimension_numbers = #tpu.dot_dimension_numbers<[1], [0], [0], [1], [0, 0, 1, 1], [], []>} : vector<8x4xbf16>, vector<4x256xbf16>, vector<8x256xf32> -> vector<8x256xf32>
    %35 = arith.addf %30, %34 : vector<8x256xf32>
    %c6 = arith.constant 6 : index
    %c0_20 = arith.constant 0 : index
    %c0_21 = arith.constant 0 : index
    %36 = vector.load %arg3[%c6, %c0_20, %c0_21] : memref<9x8x4xbf16, #tpu.memory_space<vmem>>, vector<1x8x4xbf16>
    %37 = vector.shape_cast %36 : vector<1x8x4xbf16> to vector<8x4xbf16>
    %38 = vector.extract_strided_slice %4 {offsets = [0, 36], sizes = [4, 256], strides = [1, 1]} : vector<4x294xbf16> to vector<4x256xbf16>
    %cst_22 = arith.constant dense<0.000000e+00> : vector<8x256xf32>
    %39 = tpu.matmul %37, %38, %cst_22 {dimension_numbers = #tpu.dot_dimension_numbers<[1], [0], [0], [1], [0, 0, 1, 1], [], []>} : vector<8x4xbf16>, vector<4x256xbf16>, vector<8x256xf32> -> vector<8x256xf32>
    %40 = arith.addf %35, %39 : vector<8x256xf32>
    %c7 = arith.constant 7 : index
    %c0_23 = arith.constant 0 : index
    %c0_24 = arith.constant 0 : index
    %41 = vector.load %arg3[%c7, %c0_23, %c0_24] : memref<9x8x4xbf16, #tpu.memory_space<vmem>>, vector<1x8x4xbf16>
    %42 = vector.shape_cast %41 : vector<1x8x4xbf16> to vector<8x4xbf16>
    %43 = vector.extract_strided_slice %4 {offsets = [0, 37], sizes = [4, 256], strides = [1, 1]} : vector<4x294xbf16> to vector<4x256xbf16>
    %cst_25 = arith.constant dense<0.000000e+00> : vector<8x256xf32>
    %44 = tpu.matmul %42, %43, %cst_25 {dimension_numbers = #tpu.dot_dimension_numbers<[1], [0], [0], [1], [0, 0, 1, 1], [], []>} : vector<8x4xbf16>, vector<4x256xbf16>, vector<8x256xf32> -> vector<8x256xf32>
    %45 = arith.addf %40, %44 : vector<8x256xf32>
    %c8 = arith.constant 8 : index
    %c0_26 = arith.constant 0 : index
    %c0_27 = arith.constant 0 : index
    %46 = vector.load %arg3[%c8, %c0_26, %c0_27] : memref<9x8x4xbf16, #tpu.memory_space<vmem>>, vector<1x8x4xbf16>
    %47 = vector.shape_cast %46 : vector<1x8x4xbf16> to vector<8x4xbf16>
    %48 = vector.extract_strided_slice %4 {offsets = [0, 38], sizes = [4, 256], strides = [1, 1]} : vector<4x294xbf16> to vector<4x256xbf16>
    %cst_28 = arith.constant dense<0.000000e+00> : vector<8x256xf32>
    %49 = tpu.matmul %47, %48, %cst_28 {dimension_numbers = #tpu.dot_dimension_numbers<[1], [0], [0], [1], [0, 0, 1, 1], [], []>} : vector<8x4xbf16>, vector<4x256xbf16>, vector<8x256xf32> -> vector<8x256xf32>
    %50 = arith.addf %45, %49 : vector<8x256xf32>
    %c0_29 = arith.constant 0 : index
    %c0_30 = arith.constant 0 : index
    %51 = vector.load %arg4[%c0_29, %c0_30] : memref<8x1xf32, #tpu.memory_space<vmem>>, vector<8x1xf32>
    %52 = vector.broadcast %51 : vector<8x1xf32> to vector<8x256xf32>
    %53 = arith.addf %50, %52 : vector<8x256xf32>
    %cst_31 = arith.constant 0.000000e+00 : f32
    %54 = vector.broadcast %cst_31 : f32 to vector<8x256xf32>
    %55 = arith.minimumf %53, %54 : vector<8x256xf32>
    %cst_32 = arith.constant 5.000000e-01 : f32
    %56 = vector.broadcast %cst_32 : f32 to vector<8x256xf32>
    %57 = arith.mulf %55, %56 : vector<8x256xf32>
    %58 = math.tanh %57 : vector<8x256xf32>
    %59 = math.exp %55 : vector<8x256xf32>
    %cst_33 = arith.constant 1.000000e+00 : f32
    %60 = vector.broadcast %cst_33 : f32 to vector<8x256xf32>
    %61 = arith.addf %59, %60 : vector<8x256xf32>
    %62 = arith.mulf %58, %61 : vector<8x256xf32>
    %cst_34 = arith.constant 0.000000e+00 : f32
    %63 = vector.broadcast %cst_34 : f32 to vector<8x256xf32>
    %64 = arith.cmpf ogt, %53, %63 : vector<8x256xf32>
    %65 = arith.select %64, %53, %62 : vector<8x256xi1>, vector<8x256xf32>
    %c0_35 = arith.constant 0 : index
    %c0_36 = arith.constant 0 : index
    %c0_37 = arith.constant 0 : index
    %66 = vector.load %arg5[%c0_35, %c0_36, %c0_37] : memref<1x8x256xf32, #tpu.memory_space<vmem>>, vector<1x8x256xf32>
    %67 = vector.shape_cast %66 : vector<1x8x256xf32> to vector<8x256xf32>
    %68 = vector.shape_cast %65 : vector<8x256xf32> to vector<1x8x256xf32>
    tpu.vector_store %arg5[%c0_35, %c0_36, %c0_37], %68 {strides = array<i32>} : memref<1x8x256xf32, #tpu.memory_space<vmem>>, vector<1x8x256xf32>,
    return
  }
  func.func @transform_0(%arg0: i32, %arg1: i32) -> (i32, i32, i32) {
    %c0_i32 = arith.constant 0 : i32
    %c0_i32_0 = arith.constant 0 : i32
    %c0_i32_1 = arith.constant 0 : i32
    return %arg0, %c0_i32, %c0_i32_0 : i32, i32, i32
  }
  func.func @transform_1(%arg0: i32, %arg1: i32) -> (i32, i32, i32) {
    %c0_i32 = arith.constant 0 : i32
    %c0_i32_0 = arith.constant 0 : i32
    %c0_i32_1 = arith.constant 0 : i32
    %c0_i32_2 = arith.constant 0 : i32
    return %c0_i32, %c0_i32_0, %c0_i32_1 : i32, i32, i32
  }
  func.func @transform_2(%arg0: i32, %arg1: i32) -> (i32, i32) {
    %c0_i32 = arith.constant 0 : i32
    %c0_i32_0 = arith.constant 0 : i32
    %c0_i32_1 = arith.constant 0 : i32
    return %c0_i32, %c0_i32_0 : i32, i32
  }
  func.func @transform_3(%arg0: i32, %arg1: i32) -> (i32, i32, i32) {
    %c0_i32 = arith.constant 0 : i32
    %c0_i32_0 = arith.constant 0 : i32
    return %arg0, %c0_i32, %arg1 : i32, i32, i32
  }
}

</mosaic_0001>

<llo_original>
// kernel: conv_block.1
$region0: #{conv_block.1}
  #allocation0 [shape = 'u32[]', space=smem, size = 0x4, offset = 0x4, fixed_abs, tag = 'smem constant byte address 0x4 - core index']
  #allocation1 [shape = 'u32[144,128]{1,0:T(1,128)}', space=vmem, size = 0x12000, scoped, tag = 'internal scratch']
  %s0 = inlined_call_operand.vmem [shape: bf16[2,4,640], index: 0, kind: input, shape index: {}]
  %s1 = inlined_call_operand.vmem [shape: bf16[9,8,4], index: 1, kind: input, shape index: {}]
  %s2 = inlined_call_operand.vmem [shape: f32[8,1], index: 2, kind: input, shape index: {}]
  %s3 = inlined_call_operand.vmem [shape: f32[2,8,512], index: 3, kind: output, shape index: {}]
  %s4 = sld [smem:[#allocation0]]
  $region45: #{conv_block.1} parent=0
    _
  %s6 = ssub.s32 1, %s4
  %s7 = scalar_select 0, %s6, %s4
  loop: start=0, step=1, limit=6
  $region2: #{conv_block.1} parent=0 // loop_pre_header
    _
  $region3: #{conv_block.1} parent=0 // loop_header
    %s9 = sphi 0, %s13
    %p10 = scmp.ge.s32.totalorder %s9, 6
    %s16 = sphi 0, %s28
    %s17 = sphi 0, %s24
    %s18 = sphi 0, %s16
    %s19 = sphi 0, %s17
    %s20 = sphi 0, %s18
    %s21 = sphi 0, %s19
    %s31 = sphi 0, %s33
    %s34 = sphi 0, %s31
    %s35 = sphi 0, %s34
    %s51 = sphi 0, %s35
    %s55 = sphi 0, %s55
    %s57 = sphi 0, %s55
    %s58 = sphi 0, %s57
    %s72 = sphi 0, %s58
    %s76 = sphi 0, %s76
    %s78 = sphi 0, %s76
    %s79 = sphi 0, %s78
    %s93 = sphi 0, %s79
    %s101 = sphi 0, %s103
    %s104 = sphi 0, %s101
    %s105 = sphi 0, %s104
    %s121 = sphi 0, %s105
  $region4: #{conv_block.1} parent=0 // loop_header_branch
    %12 = sbr.rel (%p10) target = $region8
  $region5: #{conv_block.1} parent=0 // loop_body
    %s14 = ssub.s32 %s9, 1
    %s15 = ssub.s32 %s9, 2
    %s22 = sadd.s32 1, %s17
    %p23 = scmp.ge.s32.totalorder %s22, 2
    %s24 = scalar_select %p23, 0, %s22
    %s25 = sadd.s32 1, %s16
    %s26 = scalar_select %p23, %s25, %s16
    %p27 = scmp.ge.s32.totalorder %s26, 2
    %s28 = scalar_select %p27, 0, %s26
    %s29 = ssub.s32 %s16, %s28
    %p30 = scmp.eq.s32.totalorder %s29, 0
    %s32 = sadd.s32 %s31, 1
    %s33 = scalar_select %p30, %s31, %s32
    %p36 = pneg %p30
    %p37 = scmp.eq.s32.totalorder %s9, 3
    %p38 = por %p36, %p37
    %p39 = scmp.ne.s32.totalorder %s31, %s34
    %p40 = scmp.eq.s32.totalorder %s9, 0
    %p41 = por %p39, %p40
    %p42 = scmp.ne.s32.totalorder %s31, %s34
    %p43 = scmp.eq.s32.totalorder %s14, 3
    %p44 = por %p42, %p43
    %p45 = scmp.ne.s32.totalorder %s34, %s35
    %p46 = scmp.eq.s32.totalorder %s14, 0
    %p47 = por %p45, %p46
    %p48 = scmp.ne.s32.totalorder %s34, %s35
    %p49 = scmp.eq.s32.totalorder %s15, 3
    %p50 = por %p48, %p49
    %p52 = scmp.ne.s32.totalorder %s35, %s51
    %p53 = scmp.eq.s32.totalorder %s15, 0
    %p54 = por %p52, %p53
    %s56 = sadd.s32 %s55, 1
    %p59 = scmp.eq.s32.totalorder %s9, 3
    %p60 = scmp.ne.s32.totalorder %s55, %s57
    %p61 = scmp.eq.s32.totalorder %s9, 0
    %p62 = por %p60, %p61
    %p63 = scmp.ne.s32.totalorder %s55, %s57
    %p64 = scmp.eq.s32.totalorder %s14, 3
    %p65 = por %p63, %p64
    %p66 = scmp.ne.s32.totalorder %s57, %s58
    %p67 = scmp.eq.s32.totalorder %s14, 0
    %p68 = por %p66, %p67
    %p69 = scmp.ne.s32.totalorder %s57, %s58
    %p70 = scmp.eq.s32.totalorder %s15, 3
    %p71 = por %p69, %p70
    %p73 = scmp.ne.s32.totalorder %s58, %s72
    %p74 = scmp.eq.s32.totalorder %s15, 0
    %p75 = por %p73, %p74
    %s77 = sadd.s32 %s76, 1
    %p80 = scmp.eq.s32.totalorder %s9, 3
    %p81 = scmp.ne.s32.totalorder %s76, %s78
    %p82 = scmp.eq.s32.totalorder %s9, 0
    %p83 = por %p81, %p82
    %p84 = scmp.ne.s32.totalorder %s76, %s78
    %p85 = scmp.eq.s32.totalorder %s14, 3
    %p86 = por %p84, %p85
    %p87 = scmp.ne.s32.totalorder %s78, %s79
    %p88 = scmp.eq.s32.totalorder %s14, 0
    %p89 = por %p87, %p88
    %p90 = scmp.ne.s32.totalorder %s78, %s79
    %p91 = scmp.eq.s32.totalorder %s15, 3
    %p92 = por %p90, %p91
    %p94 = scmp.ne.s32.totalorder %s79, %s93
    %p95 = scmp.eq.s32.totalorder %s15, 0
    %p96 = por %p94, %p95
    %s97 = ssub.s32 %s16, %s28
    %s98 = ssub.s32 %s17, %s24
    %s99 = sor.u32 %s97, %s98
    %p100 = scmp.eq.s32.totalorder %s99, 0
    %s102 = sadd.s32 %s101, 1
    %s103 = scalar_select %p100, %s101, %s102
    %p106 = pneg %p100
    %p107 = scmp.eq.s32.totalorder %s9, 3
    %p108 = por %p106, %p107
    %p109 = scmp.ne.s32.totalorder %s101, %s104
    %p110 = scmp.eq.s32.totalorder %s9, 0
    %p111 = por %p109, %p110
    %p112 = scmp.ne.s32.totalorder %s101, %s104
    %p113 = scmp.eq.s32.totalorder %s14, 3
    %p114 = por %p112, %p113
    %p115 = scmp.ne.s32.totalorder %s104, %s105
    %p116 = scmp.eq.s32.totalorder %s14, 0
    %p117 = por %p115, %p116
    %p118 = scmp.ne.s32.totalorder %s104, %s105
    %p119 = scmp.eq.s32.totalorder %s15, 3
    %p120 = por %p118, %p119
    %p122 = scmp.ne.s32.totalorder %s105, %s121
    %p123 = scmp.eq.s32.totalorder %s15, 0
    %p124 = por %p122, %p123
    %p125 = scmp.le.s32.totalorder 1, %s9
    %p126 = scmp.lt.s32.totalorder %s9, 5
    %p127 = pnand %p125, %p126
    %p128 = pneg %p127
    // Predicated region
    $region9: #{conv_block.1} parent=5 // pred_check
      _
    $region10: #{conv_block.1} parent=5 // pred_check_branch
      %130 = sbr.rel (%p127) target = $region12
    $region11: #{conv_block.1} parent=5 // pred_region
      %s131 = ssub.s32 %s9, 1
      // Predicated region
      $region13: #{conv_block.1} parent=11 // pred_check
        %p132 = pneg %p68
      $region14: #{conv_block.1} parent=11 // pred_check_branch
        %134 = sbr.rel (%p132) target = $region16
      $region15: #{conv_block.1} parent=11 // pred_region
        _
      $region16: #{conv_block.1} parent=11 // pred_fallthru
        _
      // Predicated region
      $region17: #{conv_block.1} parent=11 // pred_check
        %p135 = pneg %p89
      $region18: #{conv_block.1} parent=11 // pred_check_branch
        %137 = sbr.rel (%p135) target = $region20
      $region19: #{conv_block.1} parent=11 // pred_region
        _
      $region20: #{conv_block.1} parent=11 // pred_fallthru
        _
    $region12: #{conv_block.1} parent=5 // pred_fallthru
      _
    %p138 = scmp.lt.s32.totalorder %s9, 4
    // Predicated region
    $region21: #{conv_block.1} parent=5 // pred_check
      %p139 = pneg %p138
    $region22: #{conv_block.1} parent=5 // pred_check_branch
      %141 = sbr.rel (%p139) target = $region24
    $region23: #{conv_block.1} parent=5 // pred_region
      // Predicated region
      $region25: #{conv_block.1} parent=23 // pred_check
        %p142 = pneg %p41
      $region26: #{conv_block.1} parent=23 // pred_check_branch
        %144 = sbr.rel (%p142) target = $region28
      $region27: #{conv_block.1} parent=23 // pred_region
        %p145 = scmp.lt.s32.totalorder %s16, 1
        %s146 = scalar_select %p145, %s16, 1
        %s147 = smul.addr %s146, 5
        %s148 = smul.addr %s147, 2
        %s149 = scalar_lea.vmem %s0, %s148
      $region28: #{conv_block.1} parent=23 // pred_fallthru
        _
    $region24: #{conv_block.1} parent=5 // pred_fallthru
      _
    %p150 = scmp.le.s32.totalorder 1, %s9
    %p151 = scmp.lt.s32.totalorder %s9, 5
    %p152 = pnand %p150, %p151
    %p153 = pneg %p152
    // Predicated region
    $region29: #{conv_block.1} parent=5 // pred_check
      _
    $region30: #{conv_block.1} parent=5 // pred_check_branch
      %155 = sbr.rel (%p152) target = $region32
    $region31: #{conv_block.1} parent=5 // pred_region
      %s156 = ssub.s32 %s9, 1
      %p157 = scmp.lt.s32.totalorder %s18, 1
      %s158 = scalar_select %p157, %s18, 1
      %s159 = smul.addr %s158, 5
      %s160 = smul.addr %s159, 2
      %s161 = scalar_lea.vmem %s0, %s160
      %p162 = pneg %p47
      %p163 = pneg %p44
      %p164 = pneg %p68
      %p165 = pneg %p65
      %p166 = pneg %p89
      %p167 = pneg %p86
      %p168 = pneg %p117
      %p169 = pneg %p114
      %s170 = smul.u32 2, %s19
      %p171 = scmp.lt.s32.totalorder %s18, 1
      %s172 = scalar_select %p171, %s18, 1
      %p173 = scmp.lt.s32.totalorder %s170, 3
      %s174 = scalar_select %p173, %s170, 3
      %s175 = smul.addr %s172, 4
      %s176 = sadd.s32 %s174, %s175
      %s177 = smul.addr %s176, 8
      %s178 = scalar_lea.vmem %s3, %s177
      %p179 = scmp.lt.s32.totalorder %s18, 1
      %s180 = scalar_select %p179, %s18, 1
      %s181 = smul.addr %s180, 5
      %s182 = smul.addr %s181, 2
      %s183 = scalar_lea.vmem %s0, %s182
      %s184 = smul.u32 2, %s19
      %p185 = scmp.lt.s32.totalorder %s18, 1
      %s186 = scalar_select %p185, %s18, 1
      %p187 = scmp.lt.s32.totalorder %s184, 3
      %s188 = scalar_select %p187, %s184, 3
      %s189 = smul.addr %s186, 4
      %s190 = sadd.s32 %s188, %s189
      %s191 = smul.addr %s190, 8
      %s192 = scalar_lea.vmem %s3, %s191
      %s193 = smul.u32 2, %s19
      %s195 = smul.u32 %s19, 256
      %s196 = sshra.s32 %s195, 7
      %s197 = sand.u32 %s195, 127
      %s198 = smul.addr %s196, 2
      %s199 = scalar_lea.vmem %s183, %s198
      %v200 = vld [vmem:[%s199] sm:$0x3f]
      %v201 = vld [vmem:[%s1] sm:$0xf]
      %s202 = scalar_lea.vmem %s1, 4
      %v203 = vld [vmem:[%s202] sm:$0xf]
      %v205 = vcombine.high %v200, %v200
      %v207 = vunpack.c.l.s4 1983009808
      %v208 = vunpack.c.0.s8 %v207
      %v209 = vlaneseq
      %v210 = vshrl.u32 %v209, 7
      %v211 = vsub.s32 %v208, %v210
      %v212 = vrot.slane %v200, %v211
      %v214 = vunpack.c.l.s4 1983009808
      %v215 = vunpack.c.0.s8 %v214
      %v216 = vlaneseq
      %v217 = vshrl.u32 %v216, 7
      %v218 = vsub.s32 %v215, %v217
      %v219 = vrot.slane %v205, %v218
      %v220 = vcombine.high %v212, %v212
      %221 = vrot.lane.b32.xlu0 %v212, 127
      %v222 = vpop.permute.xlu0 %221
      %223 = vrot.lane.b32.xlu0 %v220, 127
      %v224 = vpop.permute.xlu0 %223
      %225 = vrot.lane.b32.xlu0 %v219, 127
      %v226 = vpop.permute.xlu0 %225
      %vm227 = vcmask 1039360
      %v228 = vsel %vm227, %v222, %v224
      %v229 = vsel %vm227, %v224, %v226
      %vm230 = vcmask 31744
      %v232 = vsel %vm230, %v203, 0
      %vm234 = vcmask 1041408
      %v236 = vsel %vm234, %v228, 0
      %v239 = vsel %vm234, %v229, 0
      %241 = vmatprep.subr.bf16.mxu0 0
      %242 = vmatpush1.bf16.msra.mxu0 0
      %243 = vmatprep.subr.bf16.mxu0 0
      %244 = vmatpush1.bf16.msra.mxu0 0
      %245 = vmatprep.subr.bf16.mxu0 0
      %246 = vmatpush1.bf16.msra.mxu0 0
      %247 = vmatprep.subr.bf16.mxu0 0
      %248 = vmatpush1.bf16.msra.mxu0 0
      %249 = vmatprep.subr.bf16.mxu0 0
      %250 = vmatpush1.bf16.msra.mxu0 0
      %251 = vmatprep.subr.bf16.mxu0 0
      %252 = vmatpush1.bf16.msra.mxu0 0
      %253 = vmatprep.subr.bf16.mxu0 0
      %254 = vmatpush1.bf16.msra.mxu0 0
      %255 = vmatprep.subr.bf16.mxu0 %v239
      %256 = vmatpush1.bf16.msra.mxu0 %v236
      %257 = vmatprep.subr.bf16.mxu0 0
      %258 = vmatpush2.bf16.msra.mxu0 0
      %259 = vmatprep.subr.bf16.mxu0 0
      %260 = vmatpush2.bf16.msra.mxu0 0
      %261 = vmatprep.subr.bf16.mxu0 0
      %262 = vmatpush2.bf16.msra.mxu0 0
      %263 = vmatprep.subr.bf16.mxu0 0
      %264 = vmatpush2.bf16.msra.mxu0 0
      %265 = vmatprep.subr.bf16.mxu0 0
      %266 = vmatpush2.bf16.msra.mxu0 0
      %267 = vmatprep.subr.bf16.mxu0 0
      %268 = vmatpush2.bf16.msra.mxu0 0
      %269 = vmatprep.subr.bf16.mxu0 0
      %270 = vmatpush2.bf16.msra.mxu0 0
      %271 = vmatprep.subr.bf16.mxu0 0
      %272 = vmatpush2.bf16.msra.mxu0 0
      %273 = vmatprep.mubr.bf16.mxu0 0
      %274 = vmatmul.mubr.bf16.gmra.mxu0 %v232
      %v275 = vpop.f32.mrf.mxu0
      %v276 = vadd.f32 0.0, %v275
      %v277 = vpop.f32.mrf.mxu0
      %v278 = vadd.f32 0.0, %v277
      %v279 = vpop.f32.mrf.mxu0
      %v280 = vpop.f32.mrf.mxu0
      %281 = vdwg.mxu0
      %v283 = vsel %vm230, %v201, 0
      %v286 = vsel %vm234, %v212, 0
      %v289 = vsel %vm234, %v220, 0
      %291 = vmatprep.subr.bf16.mxu0 0
      %292 = vmatpush1.bf16.msra.mxu0 0
      %293 = vmatprep.subr.bf16.mxu0 0
      %294 = vmatpush1.bf16.msra.mxu0 0
      %295 = vmatprep.subr.bf16.mxu0 0
      %296 = vmatpush1.bf16.msra.mxu0 0
      %297 = vmatprep.subr.bf16.mxu0 0
      %298 = vmatpush1.bf16.msra.mxu0 0
      %299 = vmatprep.subr.bf16.mxu0 0
      %300 = vmatpush1.bf16.msra.mxu0 0
      %301 = vmatprep.subr.bf16.mxu0 0
      %302 = vmatpush1.bf16.msra.mxu0 0
      %303 = vmatprep.subr.bf16.mxu0 0
      %304 = vmatpush1.bf16.msra.mxu0 0
      %305 = vmatprep.subr.bf16.mxu0 %v289
      %306 = vmatpush1.bf16.msra.mxu0 %v286
      %307 = vmatprep.subr.bf16.mxu0 0
      %308 = vmatpush2.bf16.msra.mxu0 0
      %309 = vmatprep.subr.bf16.mxu0 0
      %310 = vmatpush2.bf16.msra.mxu0 0
      %311 = vmatprep.subr.bf16.mxu0 0
      %312 = vmatpush2.bf16.msra.mxu0 0
      %313 = vmatprep.subr.bf16.mxu0 0
      %314 = vmatpush2.bf16.msra.mxu0 0
      %315 = vmatprep.subr.bf16.mxu0 0
      %316 = vmatpush2.bf16.msra.mxu0 0
      %317 = vmatprep.subr.bf16.mxu0 0
      %318 = vmatpush2.bf16.msra.mxu0 0
      %319 = vmatprep.subr.bf16.mxu0 0
      %320 = vmatpush2.bf16.msra.mxu0 0
      %321 = vmatprep.subr.bf16.mxu0 0
      %322 = vmatpush2.bf16.msra.mxu0 0
      %323 = vmatprep.mubr.bf16.mxu0 0
      %324 = vmatmul.mubr.bf16.gmra.mxu0 %v283
      %v325 = vpop.f32.mrf.mxu0
      %v326 = vadd.f32 %v276, %v325
      %v327 = vpop.f32.mrf.mxu0
      %v328 = vadd.f32 %v278, %v327
      %v329 = vpop.f32.mrf.mxu0
      %v330 = vpop.f32.mrf.mxu0
      %331 = vdwg.mxu0
      %s332 = scalar_lea.vmem %s1, 8
      %v333 = vld [vmem:[%s332] sm:$0xf]
      %334 = vrot.lane.b32.xlu0 %v212, 126
      %v335 = vpop.permute.xlu0 %334
      %336 = vrot.lane.b32.xlu0 %v220, 126
      %v337 = vpop.permute.xlu0 %336
      %338 = vrot.lane.b32.xlu0 %v219, 126
      %v339 = vpop.permute.xlu0 %338
      %vm340 = vcmask 1031168
      %v341 = vsel %vm340, %v335, %v337
      %v342 = vsel %vm340, %v337, %v339
      %v344 = vsel %vm230, %v333, 0
      %v347 = vsel %vm234, %v341, 0
      %v350 = vsel %vm234, %v342, 0
      %352 = vmatprep.subr.bf16.mxu0 0
      %353 = vmatpush1.bf16.msra.mxu0 0
      %354 = vmatprep.subr.bf16.mxu0 0
      %355 = vmatpush1.bf16.msra.mxu0 0
      %356 = vmatprep.subr.bf16.mxu0 0
      %357 = vmatpush1.bf16.msra.mxu0 0
      %358 = vmatprep.subr.bf16.mxu0 0
      %359 = vmatpush1.bf16.msra.mxu0 0
      %360 = vmatprep.subr.bf16.mxu0 0
      %361 = vmatpush1.bf16.msra.mxu0 0
      %362 = vmatprep.subr.bf16.mxu0 0
      %363 = vmatpush1.bf16.msra.mxu0 0
      %364 = vmatprep.subr.bf16.mxu0 0
      %365 = vmatpush1.bf16.msra.mxu0 0
      %366 = vmatprep.subr.bf16.mxu0 %v350
      %367 = vmatpush1.bf16.msra.mxu0 %v347
      %368 = vmatprep.subr.bf16.mxu0 0
      %369 = vmatpush2.bf16.msra.mxu0 0
      %370 = vmatprep.subr.bf16.mxu0 0
      %371 = vmatpush2.bf16.msra.mxu0 0
      %372 = vmatprep.subr.bf16.mxu0 0
      %373 = vmatpush2.bf16.msra.mxu0 0
      %374 = vmatprep.subr.bf16.mxu0 0
      %375 = vmatpush2.bf16.msra.mxu0 0
      %376 = vmatprep.subr.bf16.mxu0 0
      %377 = vmatpush2.bf16.msra.mxu0 0
      %378 = vmatprep.subr.bf16.mxu0 0
      %379 = vmatpush2.bf16.msra.mxu0 0
      %380 = vmatprep.subr.bf16.mxu0 0
      %381 = vmatpush2.bf16.msra.mxu0 0
      %382 = vmatprep.subr.bf16.mxu0 0
      %383 = vmatpush2.bf16.msra.mxu0 0
      %384 = vmatprep.mubr.bf16.mxu0 0
      %385 = vmatmul.mubr.bf16.gmra.mxu0 %v344
      %v386 = vpop.f32.mrf.mxu0
      %v387 = vadd.f32 0.0, %v386
      %v388 = vpop.f32.mrf.mxu0
      %v389 = vadd.f32 0.0, %v388
      %v390 = vpop.f32.mrf.mxu0
      %v391 = vpop.f32.mrf.mxu0
      %392 = vdwg.mxu0
      %v393 = vadd.f32 %v326, %v387
      %v394 = vadd.f32 %v328, %v389
      %s395 = scalar_lea.vmem %s1, 12
      %v396 = vld [vmem:[%s395] sm:$0xf]
      %397 = vrot.lane.b32.xlu0 %v212, 110
      %v398 = vpop.permute.xlu0 %397
      %399 = vrot.lane.b32.xlu0 %v220, 110
      %v400 = vpop.permute.xlu0 %399
      %401 = vrot.lane.b32.xlu0 %v219, 110
      %v402 = vpop.permute.xlu0 %401
      %vm403 = vcmask 900096
      %v404 = vsel %vm403, %v398, %v400
      %v405 = vsel %vm403, %v400, %v402
      %v407 = vsel %vm230, %v396, 0
      %v410 = vsel %vm234, %v404, 0
      %v413 = vsel %vm234, %v405, 0
      %415 = vmatprep.subr.bf16.mxu0 0
      %416 = vmatpush1.bf16.msra.mxu0 0
      %417 = vmatprep.subr.bf16.mxu0 0
      %418 = vmatpush1.bf16.msra.mxu0 0
      %419 = vmatprep.subr.bf16.mxu0 0
      %420 = vmatpush1.bf16.msra.mxu0 0
      %421 = vmatprep.subr.bf16.mxu0 0
      %422 = vmatpush1.bf16.msra.mxu0 0
      %423 = vmatprep.subr.bf16.mxu0 0
      %424 = vmatpush1.bf16.msra.mxu0 0
      %425 = vmatprep.subr.bf16.mxu0 0
      %426 = vmatpush1.bf16.msra.mxu0 0
      %427 = vmatprep.subr.bf16.mxu0 0
      %428 = vmatpush1.bf16.msra.mxu0 0
      %429 = vmatprep.subr.bf16.mxu0 %v413
      %430 = vmatpush1.bf16.msra.mxu0 %v410
      %431 = vmatprep.subr.bf16.mxu0 0
      %432 = vmatpush2.bf16.msra.mxu0 0
      %433 = vmatprep.subr.bf16.mxu0 0
      %434 = vmatpush2.bf16.msra.mxu0 0
      %435 = vmatprep.subr.bf16.mxu0 0
      %436 = vmatpush2.bf16.msra.mxu0 0
      %437 = vmatprep.subr.bf16.mxu0 0
      %438 = vmatpush2.bf16.msra.mxu0 0
      %439 = vmatprep.subr.bf16.mxu0 0
      %440 = vmatpush2.bf16.msra.mxu0 0
      %441 = vmatprep.subr.bf16.mxu0 0
      %442 = vmatpush2.bf16.msra.mxu0 0
      %443 = vmatprep.subr.bf16.mxu0 0
      %444 = vmatpush2.bf16.msra.mxu0 0
      %445 = vmatprep.subr.bf16.mxu0 0
      %446 = vmatpush2.bf16.msra.mxu0 0
      %447 = vmatprep.mubr.bf16.mxu0 0
      %448 = vmatmul.mubr.bf16.gmra.mxu0 %v407
      %v449 = vpop.f32.mrf.mxu0
      %v450 = vadd.f32 0.0, %v449
      %v451 = vpop.f32.mrf.mxu0
      %v452 = vadd.f32 0.0, %v451
      %v453 = vpop.f32.mrf.mxu0
      %v454 = vpop.f32.mrf.mxu0
      %455 = vdwg.mxu0
      %v456 = vadd.f32 %v393, %v450
      %v457 = vadd.f32 %v394, %v452
      %s458 = scalar_lea.vmem %s1, 16
      %v459 = vld [vmem:[%s458] sm:$0xf]
      %460 = vrot.lane.b32.xlu0 %v212, 109
      %v461 = vpop.permute.xlu0 %460
      %462 = vrot.lane.b32.xlu0 %v220, 109
      %v463 = vpop.permute.xlu0 %462
      %464 = vrot.lane.b32.xlu0 %v219, 109
      %v465 = vpop.permute.xlu0 %464
      %vm466 = vcmask 891904
      %v467 = vsel %vm466, %v461, %v463
      %v468 = vsel %vm466, %v463, %v465
      %v470 = vsel %vm230, %v459, 0
      %v473 = vsel %vm234, %v467, 0
      %v476 = vsel %vm234, %v468, 0
      %478 = vmatprep.subr.bf16.mxu0 0
      %479 = vmatpush1.bf16.msra.mxu0 0
      %480 = vmatprep.subr.bf16.mxu0 0
      %481 = vmatpush1.bf16.msra.mxu0 0
      %482 = vmatprep.subr.bf16.mxu0 0
      %483 = vmatpush1.bf16.msra.mxu0 0
      %484 = vmatprep.subr.bf16.mxu0 0
      %485 = vmatpush1.bf16.msra.mxu0 0
      %486 = vmatprep.subr.bf16.mxu0 0
      %487 = vmatpush1.bf16.msra.mxu0 0
      %488 = vmatprep.subr.bf16.mxu0 0
      %489 = vmatpush1.bf16.msra.mxu0 0
      %490 = vmatprep.subr.bf16.mxu0 0
      %491 = vmatpush1.bf16.msra.mxu0 0
      %492 = vmatprep.subr.bf16.mxu0 %v476
      %493 = vmatpush1.bf16.msra.mxu0 %v473
      %494 = vmatprep.subr.bf16.mxu0 0
      %495 = vmatpush2.bf16.msra.mxu0 0
      %496 = vmatprep.subr.bf16.mxu0 0
      %497 = vmatpush2.bf16.msra.mxu0 0
      %498 = vmatprep.subr.bf16.mxu0 0
      %499 = vmatpush2.bf16.msra.mxu0 0
      %500 = vmatprep.subr.bf16.mxu0 0
      %501 = vmatpush2.bf16.msra.mxu0 0
      %502 = vmatprep.subr.bf16.mxu0 0
      %503 = vmatpush2.bf16.msra.mxu0 0
      %504 = vmatprep.subr.bf16.mxu0 0
      %505 = vmatpush2.bf16.msra.mxu0 0
      %506 = vmatprep.subr.bf16.mxu0 0
      %507 = vmatpush2.bf16.msra.mxu0 0
      %508 = vmatprep.subr.bf16.mxu0 0
      %509 = vmatpush2.bf16.msra.mxu0 0
      %510 = vmatprep.mubr.bf16.mxu0 0
      %511 = vmatmul.mubr.bf16.gmra.mxu0 %v470
      %v512 = vpop.f32.mrf.mxu0
      %v513 = vadd.f32 0.0, %v512
      %v514 = vpop.f32.mrf.mxu0
      %v515 = vadd.f32 0.0, %v514
      %v516 = vpop.f32.mrf.mxu0
      %v517 = vpop.f32.mrf.mxu0
      %518 = vdwg.mxu0
      %v519 = vadd.f32 %v456, %v513
      %v520 = vadd.f32 %v457, %v515
      %s521 = scalar_lea.vmem %s1, 20
      %v522 = vld [vmem:[%s521] sm:$0xf]
      %523 = vrot.lane.b32.xlu0 %v212, 108
      %v524 = vpop.permute.xlu0 %523
      %525 = vrot.lane.b32.xlu0 %v220, 108
      %v526 = vpop.permute.xlu0 %525
      %527 = vrot.lane.b32.xlu0 %v219, 108
      %v528 = vpop.permute.xlu0 %527
      %vm529 = vcmask 883712
      %v530 = vsel %vm529, %v524, %v526
      %v531 = vsel %vm529, %v526, %v528
      %v533 = vsel %vm230, %v522, 0
      %v536 = vsel %vm234, %v530, 0
      %v539 = vsel %vm234, %v531, 0
      %541 = vmatprep.subr.bf16.mxu0 0
      %542 = vmatpush1.bf16.msra.mxu0 0
      %543 = vmatprep.subr.bf16.mxu0 0
      %544 = vmatpush1.bf16.msra.mxu0 0
      %545 = vmatprep.subr.bf16.mxu0 0
      %546 = vmatpush1.bf16.msra.mxu0 0
      %547 = vmatprep.subr.bf16.mxu0 0
      %548 = vmatpush1.bf16.msra.mxu0 0
      %549 = vmatprep.subr.bf16.mxu0 0
      %550 = vmatpush1.bf16.msra.mxu0 0
      %551 = vmatprep.subr.bf16.mxu0 0
      %552 = vmatpush1.bf16.msra.mxu0 0
      %553 = vmatprep.subr.bf16.mxu0 0
      %554 = vmatpush1.bf16.msra.mxu0 0
      %555 = vmatprep.subr.bf16.mxu0 %v539
      %556 = vmatpush1.bf16.msra.mxu0 %v536
      %557 = vmatprep.subr.bf16.mxu0 0
      %558 = vmatpush2.bf16.msra.mxu0 0
      %559 = vmatprep.subr.bf16.mxu0 0
      %560 = vmatpush2.bf16.msra.mxu0 0
      %561 = vmatprep.subr.bf16.mxu0 0
      %562 = vmatpush2.bf16.msra.mxu0 0
      %563 = vmatprep.subr.bf16.mxu0 0
      %564 = vmatpush2.bf16.msra.mxu0 0
      %565 = vmatprep.subr.bf16.mxu0 0
      %566 = vmatpush2.bf16.msra.mxu0 0
      %567 = vmatprep.subr.bf16.mxu0 0
      %568 = vmatpush2.bf16.msra.mxu0 0
      %569 = vmatprep.subr.bf16.mxu0 0
      %570 = vmatpush2.bf16.msra.mxu0 0
      %571 = vmatprep.subr.bf16.mxu0 0
      %572 = vmatpush2.bf16.msra.mxu0 0
      %573 = vmatprep.mubr.bf16.mxu0 0
      %574 = vmatmul.mubr.bf16.gmra.mxu0 %v533
      %v575 = vpop.f32.mrf.mxu0
      %v576 = vadd.f32 0.0, %v575
      %v577 = vpop.f32.mrf.mxu0
      %v578 = vadd.f32 0.0, %v577
      %v579 = vpop.f32.mrf.mxu0
      %v580 = vpop.f32.mrf.mxu0
      %581 = vdwg.mxu0
      %v582 = vadd.f32 %v519, %v576
      %v583 = vadd.f32 %v520, %v578
      %s584 = scalar_lea.vmem %s1, 24
      %v585 = vld [vmem:[%s584] sm:$0xf]
      %586 = vrot.lane.b32.xlu0 %v212, 92
      %v587 = vpop.permute.xlu0 %586
      %588 = vrot.lane.b32.xlu0 %v220, 92
      %v589 = vpop.permute.xlu0 %588
      %590 = vrot.lane.b32.xlu0 %v219, 92
      %v591 = vpop.permute.xlu0 %590
      %vm592 = vcmask 752640
      %v593 = vsel %vm592, %v587, %v589
      %v594 = vsel %vm592, %v589, %v591
      %v596 = vsel %vm230, %v585, 0
      %v599 = vsel %vm234, %v593, 0
      %v602 = vsel %vm234, %v594, 0
      %604 = vmatprep.subr.bf16.mxu0 0
      %605 = vmatpush1.bf16.msra.mxu0 0
      %606 = vmatprep.subr.bf16.mxu0 0
      %607 = vmatpush1.bf16.msra.mxu0 0
      %608 = vmatprep.subr.bf16.mxu0 0
      %609 = vmatpush1.bf16.msra.mxu0 0
      %610 = vmatprep.subr.bf16.mxu0 0
      %611 = vmatpush1.bf16.msra.mxu0 0
      %612 = vmatprep.subr.bf16.mxu0 0
      %613 = vmatpush1.bf16.msra.mxu0 0
      %614 = vmatprep.subr.bf16.mxu0 0
      %615 = vmatpush1.bf16.msra.mxu0 0
      %616 = vmatprep.subr.bf16.mxu0 0
      %617 = vmatpush1.bf16.msra.mxu0 0
      %618 = vmatprep.subr.bf16.mxu0 %v602
      %619 = vmatpush1.bf16.msra.mxu0 %v599
      %620 = vmatprep.subr.bf16.mxu0 0
      %621 = vmatpush2.bf16.msra.mxu0 0
      %622 = vmatprep.subr.bf16.mxu0 0
      %623 = vmatpush2.bf16.msra.mxu0 0
      %624 = vmatprep.subr.bf16.mxu0 0
      %625 = vmatpush2.bf16.msra.mxu0 0
      %626 = vmatprep.subr.bf16.mxu0 0
      %627 = vmatpush2.bf16.msra.mxu0 0
      %628 = vmatprep.subr.bf16.mxu0 0
      %629 = vmatpush2.bf16.msra.mxu0 0
      %630 = vmatprep.subr.bf16.mxu0 0
      %631 = vmatpush2.bf16.msra.mxu0 0
      %632 = vmatprep.subr.bf16.mxu0 0
      %633 = vmatpush2.bf16.msra.mxu0 0
      %634 = vmatprep.subr.bf16.mxu0 0
      %635 = vmatpush2.bf16.msra.mxu0 0
      %636 = vmatprep.mubr.bf16.mxu0 0
      %637 = vmatmul.mubr.bf16.gmra.mxu0 %v596
      %v638 = vpop.f32.mrf.mxu0
      %v639 = vadd.f32 0.0, %v638
      %v640 = vpop.f32.mrf.mxu0
      %v641 = vadd.f32 0.0, %v640
      %v642 = vpop.f32.mrf.mxu0
      %v643 = vpop.f32.mrf.mxu0
      %644 = vdwg.mxu0
      %v645 = vadd.f32 %v582, %v639
      %v646 = vadd.f32 %v583, %v641
      %s647 = scalar_lea.vmem %s1, 28
      %v648 = vld [vmem:[%s647] sm:$0xf]
      %649 = vrot.lane.b32.xlu0 %v212, 91
      %v650 = vpop.permute.xlu0 %649
      %651 = vrot.lane.b32.xlu0 %v220, 91
      %v652 = vpop.permute.xlu0 %651
      %653 = vrot.lane.b32.xlu0 %v219, 91
      %v654 = vpop.permute.xlu0 %653
      %vm655 = vcmask 744448
      %v656 = vsel %vm655, %v650, %v652
      %v657 = vsel %vm655, %v652, %v654
      %v659 = vsel %vm230, %v648, 0
      %v662 = vsel %vm234, %v656, 0
      %v665 = vsel %vm234, %v657, 0
      %667 = vmatprep.subr.bf16.mxu0 0
      %668 = vmatpush1.bf16.msra.mxu0 0
      %669 = vmatprep.subr.bf16.mxu0 0
      %670 = vmatpush1.bf16.msra.mxu0 0
      %671 = vmatprep.subr.bf16.mxu0 0
      %672 = vmatpush1.bf16.msra.mxu0 0
      %673 = vmatprep.subr.bf16.mxu0 0
      %674 = vmatpush1.bf16.msra.mxu0 0
      %675 = vmatprep.subr.bf16.mxu0 0
      %676 = vmatpush1.bf16.msra.mxu0 0
      %677 = vmatprep.subr.bf16.mxu0 0
      %678 = vmatpush1.bf16.msra.mxu0 0
      %679 = vmatprep.subr.bf16.mxu0 0
      %680 = vmatpush1.bf16.msra.mxu0 0
      %681 = vmatprep.subr.bf16.mxu0 %v665
      %682 = vmatpush1.bf16.msra.mxu0 %v662
      %683 = vmatprep.subr.bf16.mxu0 0
      %684 = vmatpush2.bf16.msra.mxu0 0
      %685 = vmatprep.subr.bf16.mxu0 0
      %686 = vmatpush2.bf16.msra.mxu0 0
      %687 = vmatprep.subr.bf16.mxu0 0
      %688 = vmatpush2.bf16.msra.mxu0 0
      %689 = vmatprep.subr.bf16.mxu0 0
      %690 = vmatpush2.bf16.msra.mxu0 0
      %691 = vmatprep.subr.bf16.mxu0 0
      %692 = vmatpush2.bf16.msra.mxu0 0
      %693 = vmatprep.subr.bf16.mxu0 0
      %694 = vmatpush2.bf16.msra.mxu0 0
      %695 = vmatprep.subr.bf16.mxu0 0
      %696 = vmatpush2.bf16.msra.mxu0 0
      %697 = vmatprep.subr.bf16.mxu0 0
      %698 = vmatpush2.bf16.msra.mxu0 0
      %699 = vmatprep.mubr.bf16.mxu0 0
      %700 = vmatmul.mubr.bf16.gmra.mxu0 %v659
      %v701 = vpop.f32.mrf.mxu0
      %v702 = vadd.f32 0.0, %v701
      %v703 = vpop.f32.mrf.mxu0
      %v704 = vadd.f32 0.0, %v703
      %v705 = vpop.f32.mrf.mxu0
      %v706 = vpop.f32.mrf.mxu0
      %707 = vdwg.mxu0
      %v708 = vadd.f32 %v645, %v702
      %v709 = vadd.f32 %v646, %v704
      %s710 = scalar_lea.vmem %s1, 32
      %v711 = vld [vmem:[%s710] sm:$0xf]
      %712 = vrot.lane.b32.xlu0 %v212, 90
      %v713 = vpop.permute.xlu0 %712
      %714 = vrot.lane.b32.xlu0 %v220, 90
      %v715 = vpop.permute.xlu0 %714
      %716 = vrot.lane.b32.xlu0 %v219, 90
      %v717 = vpop.permute.xlu0 %716
      %vm718 = vcmask 736256
      %v719 = vsel %vm718, %v713, %v715
      %v720 = vsel %vm718, %v715, %v717
      %v722 = vsel %vm230, %v711, 0
      %v725 = vsel %vm234, %v719, 0
      %v728 = vsel %vm234, %v720, 0
      %730 = vmatprep.subr.bf16.mxu0 0
      %731 = vmatpush1.bf16.msra.mxu0 0
      %732 = vmatprep.subr.bf16.mxu0 0
      %733 = vmatpush1.bf16.msra.mxu0 0
      %734 = vmatprep.subr.bf16.mxu0 0
      %735 = vmatpush1.bf16.msra.mxu0 0
      %736 = vmatprep.subr.bf16.mxu0 0
      %737 = vmatpush1.bf16.msra.mxu0 0
      %738 = vmatprep.subr.bf16.mxu0 0
      %739 = vmatpush1.bf16.msra.mxu0 0
      %740 = vmatprep.subr.bf16.mxu0 0
      %741 = vmatpush1.bf16.msra.mxu0 0
      %742 = vmatprep.subr.bf16.mxu0 0
      %743 = vmatpush1.bf16.msra.mxu0 0
      %744 = vmatprep.subr.bf16.mxu0 %v728
      %745 = vmatpush1.bf16.msra.mxu0 %v725
      %746 = vmatprep.subr.bf16.mxu0 0
      %747 = vmatpush2.bf16.msra.mxu0 0
      %748 = vmatprep.subr.bf16.mxu0 0
      %749 = vmatpush2.bf16.msra.mxu0 0
      %750 = vmatprep.subr.bf16.mxu0 0
      %751 = vmatpush2.bf16.msra.mxu0 0
      %752 = vmatprep.subr.bf16.mxu0 0
      %753 = vmatpush2.bf16.msra.mxu0 0
      %754 = vmatprep.subr.bf16.mxu0 0
      %755 = vmatpush2.bf16.msra.mxu0 0
      %756 = vmatprep.subr.bf16.mxu0 0
      %757 = vmatpush2.bf16.msra.mxu0 0
      %758 = vmatprep.subr.bf16.mxu0 0
      %759 = vmatpush2.bf16.msra.mxu0 0
      %760 = vmatprep.subr.bf16.mxu0 0
      %761 = vmatpush2.bf16.msra.mxu0 0
      %762 = vmatprep.mubr.bf16.mxu0 0
      %763 = vmatmul.mubr.bf16.gmra.mxu0 %v722
      %v764 = vpop.f32.mrf.mxu0
      %v765 = vadd.f32 0.0, %v764
      %v766 = vpop.f32.mrf.mxu0
      %v767 = vadd.f32 0.0, %v766
      %v768 = vpop.f32.mrf.mxu0
      %v769 = vpop.f32.mrf.mxu0
      %770 = vdwg.mxu0
      %v771 = vadd.f32 %v708, %v765
      %v772 = vadd.f32 %v709, %v767
      %v773 = vld [vmem:[%s2] sm:$0xff]
      %775 = vset.pattern.permute.xlu0 0
      %776 = vperm.xlu0 %775, %v773
      %v777 = vpop.permute.xlu0 %776
      %v779 = vadd.f32 %v771, %v777
      %v780 = vadd.f32 %v772, %v777
      %v781 = vmin.f32 %v779, 0.0
      %v782 = vmin.f32 %v780, 0.0
      %v783 = vmul.f32 %v781, 0.5
      %v784 = vmul.f32 %v782, 0.5
      %v785 = vtanh.pop %v783
      %v786 = vtanh.pop %v784
      %v787 = vmul.f32 %v781, 1.442695
      %v788 = vpow.pop %v787
      %v789 = vmul.f32 %v782, 1.442695
      %v790 = vpow.pop %v789
      %v791 = vadd.f32 %v788, 1.0
      %v792 = vadd.f32 %v790, 1.0
      %v793 = vmul.f32 %v785, %v791
      %v794 = vmul.f32 %v786, %v792
      %vm795 = vcmp.gt.f32.partialorder %v779, 0.0
      %vm796 = vcmp.gt.f32.partialorder %v780, 0.0
      %v797 = vsel %vm795, %v779, %v793
      %v798 = vsel %vm796, %v780, %v794
      %799 = vst [vmem:[%s192] sm:$0xff] %v797
      %800 = vst [vmem:[%s192 + $0x8] sm:$0xff] %v798
      %s801 = smul.u32 2, %s19
      %p802 = scmp.lt.s32.totalorder %s18, 1
      %s803 = scalar_select %p802, %s18, 1
      %p804 = scmp.lt.s32.totalorder %s801, 3
      %s805 = scalar_select %p804, %s801, 3
      %s806 = smul.addr %s803, 4
      %s807 = sadd.s32 %s805, %s806
      %s808 = smul.addr %s807, 8
      %s809 = scalar_lea.vmem %s3, %s808
      // Predicated region
      $region33: #{conv_block.1} parent=31 // pred_check
        %p810 = pneg %p114
      $region34: #{conv_block.1} parent=31 // pred_check_branch
        %812 = sbr.rel (%p810) target = $region36
      $region35: #{conv_block.1} parent=31 // pred_region
        %s813 = smul.u32 2, %s19
      $region36: #{conv_block.1} parent=31 // pred_fallthru
        _
    $region32: #{conv_block.1} parent=5 // pred_fallthru
      _
    %p814 = scmp.le.s32.totalorder 2, %s9
    // Predicated region
    $region37: #{conv_block.1} parent=5 // pred_check
      %p815 = pneg %p814
    $region38: #{conv_block.1} parent=5 // pred_check_branch
      %817 = sbr.rel (%p815) target = $region40
    $region39: #{conv_block.1} parent=5 // pred_region
      %s818 = ssub.s32 %s9, 2
      // Predicated region
      $region41: #{conv_block.1} parent=39 // pred_check
        %p819 = pneg %p120
      $region42: #{conv_block.1} parent=39 // pred_check_branch
        %821 = sbr.rel (%p819) target = $region44
      $region43: #{conv_block.1} parent=39 // pred_region
        %s822 = smul.u32 2, %s21
        %p823 = scmp.lt.s32.totalorder %s20, 1
        %s824 = scalar_select %p823, %s20, 1
        %p825 = scmp.lt.s32.totalorder %s822, 3
        %s826 = scalar_select %p825, %s822, 3
        %s827 = smul.addr %s824, 4
        %s828 = sadd.s32 %s826, %s827
        %s829 = smul.addr %s828, 8
        %s830 = scalar_lea.vmem %s3, %s829
      $region44: #{conv_block.1} parent=39 // pred_fallthru
        _
    $region40: #{conv_block.1} parent=5 // pred_fallthru
      _
  $region6: #{conv_block.1} parent=0 // loop_footer
    %s13 = sadd.s32 1, %s9
  $region7: #{conv_block.1} parent=0 // loop_footer_branch
    %8 = sbr.rel target = $region3
  $region8: #{conv_block.1} parent=0 // loop_exit
    _

</llo_original>
